<compile_context>
chip_gen: v7x
topology: tpu7x:2x2x1
jax: 0.10.0
libtpu: 0.0.40
codegen_flags: <defaults>
</compile_context>

<pallas_src>
import functools

import jax
import jax.numpy as jnp
from jax.experimental import pallas as pl
from jax.experimental.pallas import tpu as pltpu

LANES = 128
BLOCK_ROWS = 8192   # (8192, 128) f32 tile = 4 MiB / input / pipeline buffer


def _round_up(a, b):
    return ((a + b - 1) // b) * b


def _tversky_sums_kernel(x_ref, t_ref, o_ref, *, block_rows, total_rows,
                         needs_mask):
    j = pl.program_id(0)   # sequential block stream ("arbitrary" axis)

    @pl.when(j == 0)
    def _():
        o_ref[...] = jnp.zeros_like(o_ref)

    def accumulate(mask_rows):
        x = x_ref[...].astype(jnp.float32)   # no-op when inputs already f32
        t = t_ref[...].astype(jnp.float32)

        if mask_rows:
            # Only the final (ragged) block reaches here; zero rows past the
            # logical end so garbage in the overhanging fetch contributes 0.
            row0 = j * block_rows
            row_ids = row0 + jax.lax.broadcasted_iota(jnp.int32, x.shape, 0)
            valid = row_ids < total_rows
            x = jnp.where(valid, x, 0.0)
            t = jnp.where(valid, t, 0.0)

        groups = block_rows // 8
        xr = x.reshape(groups, 8, LANES)
        tr = t.reshape(groups, 8, LANES)

        # VPU-only partial reductions down to one (8, 128) tile per quantity,
        # accumulated in the resident output block.
        o_ref[0] += jnp.sum(xr * tr, axis=0)   # partial sum(x * t)  -> TP
        o_ref[1] += jnp.sum(xr, axis=0)        # partial sum(x)
        o_ref[2] += jnp.sum(tr, axis=0)        # partial sum(t)

    if needs_mask:
        last = pl.num_programs(0) - 1

        @pl.when(j == last)
        def _():
            accumulate(True)    # masked path: ragged final block only

        @pl.when(j != last)
        def _():
            accumulate(False)   # hot path: no mask work
    else:
        accumulate(False)


def tversky_loss(inputs, targets, alpha=0.5, beta=0.5, smooth=1.0):
    """Pallas TPU implementation of TverskyLoss.forward. Returns a scalar."""
    x = jnp.reshape(inputs, (-1,))
    t = jnp.reshape(targets, (-1,))
    n = x.shape[0]

    if n == 0:
        # Empty input: TP = FP = FN = 0 (same as the torch reference).
        z = jnp.float32(0.0)
        return 1.0 - (z + smooth) / (z + alpha * z + beta * z + smooth)

    # Only pad (with zeros, exact for all three sums) when the element count is
    # not a multiple of the lane width; no dtype cast here.
    padded = _round_up(n, LANES)
    if padded != n:
        x = jnp.pad(x, (0, padded - n))
        t = jnp.pad(t, (0, padded - n))

    rows = padded // LANES

    # Round small inputs up to the dtype's native sublane packing
    # (8 rows/vreg for 32-bit, 16 for bf16, 32 for int8/fp8).
    itemsize = jnp.dtype(x.dtype).itemsize
    sublane = max(8, 32 // max(itemsize, 1))
    block_rows = min(BLOCK_ROWS, _round_up(rows, sublane))
    num_blocks = pl.cdiv(rows, block_rows)
    needs_mask = (rows % block_rows) != 0   # only the final block can be ragged

    x2 = x.reshape(rows, LANES)
    t2 = t.reshape(rows, LANES)

    kernel = functools.partial(
        _tversky_sums_kernel,
        block_rows=block_rows,
        total_rows=rows,
        needs_mask=needs_mask,
    )

    partials = pl.pallas_call(
        kernel,
        out_shape=jax.ShapeDtypeStruct((3, 8, LANES), jnp.float32),
        grid_spec=pltpu.PrefetchScalarGridSpec(
            num_scalar_prefetch=0,
            grid=(num_blocks,),
            in_specs=[
                pl.BlockSpec((block_rows, LANES), lambda j: (j, 0)),
                pl.BlockSpec((block_rows, LANES), lambda j: (j, 0)),
            ],
            out_specs=pl.BlockSpec((3, 8, LANES), lambda j: (0, 0, 0)),
        ),
        compiler_params=pltpu.CompilerParams(
            dimension_semantics=("arbitrary",)),
    )(x2, t2)

    # Tiny epilogue: combine the (8,128) partials and form the loss.
    sums = jnp.sum(partials.reshape(3, 8 * LANES), axis=1)
    tp = sums[0]
    fp = sums[1] - tp   # sum(x) - sum(x*t) == sum((1-t)*x)
    fn = sums[2] - tp   # sum(t) - sum(x*t) == sum(t*(1-x))
    tversky = (tp + smooth) / (tp + alpha * fp + beta * fn + smooth)
    return 1.0 - tversky


def _reference(inputs, targets, alpha=0.5, beta=0.5, smooth=1.0):
    x = jnp.reshape(inputs, (-1,)).astype(jnp.float32)
    t = jnp.reshape(targets, (-1,)).astype(jnp.float32)
    tp = jnp.sum(x * t)
    fp = jnp.sum((1.0 - t) * x)
    fn = jnp.sum(t * (1.0 - x))
    return 1.0 - (tp + smooth) / (tp + alpha * fp + beta * fn + smooth)


if __name__ == "__main__":
    key = jax.random.PRNGKey(0)
    k1, k2 = jax.random.split(key)
    # Typical segmentation use: probabilities vs. binary mask, NCHW.
    inputs = jax.nn.sigmoid(jax.random.normal(k1, (2, 4, 16, 16), jnp.float32))
    targets = (jax.random.uniform(k2, (2, 4, 16, 16)) > 0.5).astype(jnp.float32)

    loss = tversky_loss(inputs, targets)
    loss = jax.block_until_ready(loss)

    ref = _reference(inputs, targets)
    assert jnp.allclose(loss, ref, atol=1e-5, rtol=1e-5), (loss, ref)
    print("KERNEL_OK")
</pallas_src>

<mosaic_0001>
module attributes {stable_mosaic.version = 11 : i64} {
  func.func @_tversky_sums_kernel(%arg0: i32, %arg1: memref<16x128xf32, #tpu.memory_space<vmem>>, %arg2: memref<16x128xf32, #tpu.memory_space<vmem>>, %arg3: memref<3x8x128xf32, #tpu.memory_space<vmem>>) attributes {dimension_semantics = [#tpu.dimension_semantics<arbitrary>], iteration_bounds = array<i64: 1>, scalar_prefetch = 0 : i64, scratch_operands = 0 : i64, tpu.core_type = #tpu.core_type<tc>, window_params = [{transform_indices = @transform_0, window_bounds = array<i64: 16, 128>}, {transform_indices = @transform_1, window_bounds = array<i64: 16, 128>}, {pipeline_mode = #tpu.pipeline_mode<synchronous>, transform_indices = @transform_2, window_bounds = array<i64: 3, 8, 128>}]} {
    %c0_i32 = arith.constant 0 : i32
    %0 = arith.cmpi eq, %arg0, %c0_i32 : i32
    %1 = arith.extui %0 : i1 to i32
    %c0_i32_0 = arith.constant 0 : i32
    %2 = arith.cmpi ne, %1, %c0_i32_0 : i32
    scf.if %2 {
      %cst_22 = arith.constant 0.000000e+00 : f32
      %29 = vector.broadcast %cst_22 : f32 to vector<3x8x128xf32>
      %c0_23 = arith.constant 0 : index
      %c0_24 = arith.constant 0 : index
      %c0_25 = arith.constant 0 : index
      %30 = vector.load %arg3[%c0_23, %c0_24, %c0_25] : memref<3x8x128xf32, #tpu.memory_space<vmem>>, vector<3x8x128xf32>
      tpu.vector_store %arg3[%c0_23, %c0_24, %c0_25], %29 {strides = array<i32>} : memref<3x8x128xf32, #tpu.memory_space<vmem>>, vector<3x8x128xf32>,
    } else {
    }
    %c0 = arith.constant 0 : index
    %c0_1 = arith.constant 0 : index
    %3 = vector.load %arg1[%c0, %c0_1] : memref<16x128xf32, #tpu.memory_space<vmem>>, vector<16x128xf32>
    %c0_2 = arith.constant 0 : index
    %c0_3 = arith.constant 0 : index
    %4 = vector.load %arg2[%c0_2, %c0_3] : memref<16x128xf32, #tpu.memory_space<vmem>>, vector<16x128xf32>
    %5 = vector.shape_cast %3 : vector<16x128xf32> to vector<2x8x128xf32>
    %6 = vector.shape_cast %4 : vector<16x128xf32> to vector<2x8x128xf32>
    %c0_4 = arith.constant 0 : index
    %c0_5 = arith.constant 0 : index
    %c0_6 = arith.constant 0 : index
    %7 = vector.load %arg3[%c0_4, %c0_5, %c0_6] : memref<3x8x128xf32, #tpu.memory_space<vmem>>, vector<1x8x128xf32>
    %8 = vector.shape_cast %7 : vector<1x8x128xf32> to vector<8x128xf32>
    %9 = arith.mulf %5, %6 : vector<2x8x128xf32>
    %cst = arith.constant dense<0.000000e+00> : vector<8x128xf32>
    %10 = vector.multi_reduction <add>, %9, %cst [0] : vector<2x8x128xf32> to vector<8x128xf32>
    %11 = arith.addf %8, %10 : vector<8x128xf32>
    %c0_7 = arith.constant 0 : index
    %c0_8 = arith.constant 0 : index
    %c0_9 = arith.constant 0 : index
    %12 = vector.load %arg3[%c0_7, %c0_8, %c0_9] : memref<3x8x128xf32, #tpu.memory_space<vmem>>, vector<1x8x128xf32>
    %13 = vector.shape_cast %12 : vector<1x8x128xf32> to vector<8x128xf32>
    %14 = vector.shape_cast %11 : vector<8x128xf32> to vector<1x8x128xf32>
    tpu.vector_store %arg3[%c0_7, %c0_8, %c0_9], %14 {strides = array<i32>} : memref<3x8x128xf32, #tpu.memory_space<vmem>>, vector<1x8x128xf32>,
    %c1 = arith.constant 1 : index
    %c0_10 = arith.constant 0 : index
    %c0_11 = arith.constant 0 : index
    %15 = vector.load %arg3[%c1, %c0_10, %c0_11] : memref<3x8x128xf32, #tpu.memory_space<vmem>>, vector<1x8x128xf32>
    %16 = vector.shape_cast %15 : vector<1x8x128xf32> to vector<8x128xf32>
    %cst_12 = arith.constant dense<0.000000e+00> : vector<8x128xf32>
    %17 = vector.multi_reduction <add>, %5, %cst_12 [0] : vector<2x8x128xf32> to vector<8x128xf32>
    %18 = arith.addf %16, %17 : vector<8x128xf32>
    %c1_13 = arith.constant 1 : index
    %c0_14 = arith.constant 0 : index
    %c0_15 = arith.constant 0 : index
    %19 = vector.load %arg3[%c1_13, %c0_14, %c0_15] : memref<3x8x128xf32, #tpu.memory_space<vmem>>, vector<1x8x128xf32>
    %20 = vector.shape_cast %19 : vector<1x8x128xf32> to vector<8x128xf32>
    %21 = vector.shape_cast %18 : vector<8x128xf32> to vector<1x8x128xf32>
    tpu.vector_store %arg3[%c1_13, %c0_14, %c0_15], %21 {strides = array<i32>} : memref<3x8x128xf32, #tpu.memory_space<vmem>>, vector<1x8x128xf32>,
    %c2 = arith.constant 2 : index
    %c0_16 = arith.constant 0 : index
    %c0_17 = arith.constant 0 : index
    %22 = vector.load %arg3[%c2, %c0_16, %c0_17] : memref<3x8x128xf32, #tpu.memory_space<vmem>>, vector<1x8x128xf32>
    %23 = vector.shape_cast %22 : vector<1x8x128xf32> to vector<8x128xf32>
    %cst_18 = arith.constant dense<0.000000e+00> : vector<8x128xf32>
    %24 = vector.multi_reduction <add>, %6, %cst_18 [0] : vector<2x8x128xf32> to vector<8x128xf32>
    %25 = arith.addf %23, %24 : vector<8x128xf32>
    %c2_19 = arith.constant 2 : index
    %c0_20 = arith.constant 0 : index
    %c0_21 = arith.constant 0 : index
    %26 = vector.load %arg3[%c2_19, %c0_20, %c0_21] : memref<3x8x128xf32, #tpu.memory_space<vmem>>, vector<1x8x128xf32>
    %27 = vector.shape_cast %26 : vector<1x8x128xf32> to vector<8x128xf32>
    %28 = vector.shape_cast %25 : vector<8x128xf32> to vector<1x8x128xf32>
    tpu.vector_store %arg3[%c2_19, %c0_20, %c0_21], %28 {strides = array<i32>} : memref<3x8x128xf32, #tpu.memory_space<vmem>>, vector<1x8x128xf32>,
    return
  }
  func.func @transform_0(%arg0: i32) -> (i32, i32) {
    %c0_i32 = arith.constant 0 : i32
    %c0_i32_0 = arith.constant 0 : i32
    return %arg0, %c0_i32 : i32, i32
  }
  func.func @transform_1(%arg0: i32) -> (i32, i32) {
    %c0_i32 = arith.constant 0 : i32
    %c0_i32_0 = arith.constant 0 : i32
    return %arg0, %c0_i32 : i32, i32
  }
  func.func @transform_2(%arg0: i32) -> (i32, i32, i32) {
    %c0_i32 = arith.constant 0 : i32
    %c0_i32_0 = arith.constant 0 : i32
    %c0_i32_1 = arith.constant 0 : i32
    %c0_i32_2 = arith.constant 0 : i32
    return %c0_i32, %c0_i32_0, %c0_i32_1 : i32, i32, i32
  }
}

</mosaic_0001>

<llo_original>
// kernel: tpu_custom_call.1
$region0: #{tpu_custom_call.1}
  #allocation0 [shape = 'u32[]', space=smem, size = 0x4, offset = 0x4, fixed_abs, tag = 'smem constant byte address 0x4 - core index']
  #allocation1 [shape = 'u32[144,128]{1,0:T(1,128)}', space=vmem, size = 0x12000, scoped, tag = 'internal scratch']
  %s0 = inlined_call_operand.hbm [shape: f32[16,128], index: 0, kind: input, shape index: {}]
  %s1 = inlined_call_operand.hbm [shape: f32[16,128], index: 1, kind: input, shape index: {}]
  %s2 = inlined_call_operand.hbm [shape: f32[3,8,128], index: 2, kind: output, shape index: {}]
  %s3 = sld [smem:[#allocation0]]
  $region30: #{tpu_custom_call.1} parent=0
    _
  %s5 = ssub.s32 1, %s3
  %s6 = scalar_select 0, %s5, %s3
  $region1: #{tpu_custom_call.1} parent=0
    #allocation2 [shape = 'u8[8192]{0}', space=vmem, size = 0x2000, scoped, tag = 'input window, operand 0, single buffered']
    #allocation3 [shape = 's32[1]{0}', space=sflag, size = 0x4, scoped, tag = 'scoped memory for tpu_custom_call.1']
    #allocation4 [shape = 's32[1]{0}', space=sflag, size = 0x4, scoped, tag = 'scoped memory for tpu_custom_call.1']
    #allocation5 [shape = 'u8[8192]{0}', space=vmem, size = 0x2000, scoped, tag = 'input window, operand 1, single buffered']
    #allocation6 [shape = 's32[1]{0}', space=sflag, size = 0x4, scoped, tag = 'scoped memory for tpu_custom_call.1']
    #allocation7 [shape = 'u8[12288]{0}', space=vmem, size = 0x3000, scoped, tag = 'output window, operand 0, single buffered']
    %7 = vsyncpa [#allocation3], 0
    %8 = vsyncpa [#allocation6], 0
    %9 = vsyncpa [#allocation4], 0
    // Predicated region
    $region2: #{tpu_custom_call.1} parent=1 // pred_check
      _
    $region3: #{tpu_custom_call.1} parent=1 // pred_check_branch
      %11 = sbr.rel (0) target = $region5
    $region4: #{tpu_custom_call.1} parent=1 // pred_region
      %s13 = ssub.s32 256, 256
      %14 = vsyncadd [#allocation3], %s13
      %s15 = sshll.u32 [#allocation2], 4
      %s16 = int_to_ptr.vmem [resolvable:$true] %s15
      %21 = dma.hbm_to_vmem [thread:$0]  %s0, 256, %s16, [#allocation3], 128, 128, 8
    $region5: #{tpu_custom_call.1} parent=1 // pred_fallthru
      _
    // Predicated region
    $region6: #{tpu_custom_call.1} parent=1 // pred_check
      _
    $region7: #{tpu_custom_call.1} parent=1 // pred_check_branch
      %23 = sbr.rel (0) target = $region9
    $region8: #{tpu_custom_call.1} parent=1 // pred_region
      %s25 = ssub.s32 256, 256
      %26 = vsyncadd [#allocation6], %s25
      %s27 = sshll.u32 [#allocation5], 4
      %s28 = int_to_ptr.vmem [resolvable:$true] %s27
      %33 = dma.hbm_to_vmem [thread:$0]  %s1, 256, %s28, [#allocation6], 128, 128, 8
    $region9: #{tpu_custom_call.1} parent=1 // pred_fallthru
      _
    // Predicated region
    $region10: #{tpu_custom_call.1} parent=1 // pred_check
      _
    $region11: #{tpu_custom_call.1} parent=1 // pred_check_branch
      %35 = sbr.rel (0) target = $region13
    $region12: #{tpu_custom_call.1} parent=1 // pred_region
      %36 = dma.done [#allocation3], 256
    $region13: #{tpu_custom_call.1} parent=1 // pred_fallthru
      _
    // Predicated region
    $region14: #{tpu_custom_call.1} parent=1 // pred_check
      _
    $region15: #{tpu_custom_call.1} parent=1 // pred_check_branch
      %38 = sbr.rel (0) target = $region17
    $region16: #{tpu_custom_call.1} parent=1 // pred_region
      %39 = dma.done [#allocation6], 256
    $region17: #{tpu_custom_call.1} parent=1 // pred_fallthru
      _
    %p40 = scmp.eq.s32.totalorder 0, 0
    // Predicated region
    $region18: #{tpu_custom_call.1} parent=1 // pred_check
      %p41 = pneg %p40
    $region19: #{tpu_custom_call.1} parent=1 // pred_check_branch
      %43 = sbr.rel (%p41) target = $region21
    $region20: #{tpu_custom_call.1} parent=1 // pred_region
      %44 = vst [vmem:[#allocation7] sm:$0xff] 0.0
      %45 = vst [vmem:[#allocation7 + $0x8] sm:$0xff] 0.0
      %46 = vst [vmem:[#allocation7 + $0x10] sm:$0xff] 0.0
    $region21: #{tpu_custom_call.1} parent=1 // pred_fallthru
      _
    %v47 = vld [vmem:[#allocation2] sm:$0xff]
    %v48 = vld [vmem:[#allocation2 + $0x8] sm:$0xff]
    %v49 = vld [vmem:[#allocation5] sm:$0xff]
    %v50 = vld [vmem:[#allocation5 + $0x8] sm:$0xff]
    %v51 = vld [vmem:[#allocation7] sm:$0xff]
    %v52 = vmul.f32 %v47, %v49
    %v53 = vmul.f32 %v48, %v50
    %v54 = vadd.f32 %v52, %v53
    %v55 = vadd.f32 %v51, %v54
    %56 = vst [vmem:[#allocation7] sm:$0xff] %v55
    %s57 = scalar_lea.vmem [#allocation7], 8
    %v58 = vld [vmem:[%s57] sm:$0xff]
    %v59 = vadd.f32 %v47, %v48
    %v60 = vadd.f32 %v58, %v59
    %61 = vst [vmem:[%s57] sm:$0xff] %v60
    %s62 = scalar_lea.vmem [#allocation7], 16
    %v63 = vld [vmem:[%s62] sm:$0xff]
    %v64 = vadd.f32 %v49, %v50
    %v65 = vadd.f32 %v63, %v64
    %66 = vst [vmem:[%s62] sm:$0xff] %v65
    // Predicated region
    $region22: #{tpu_custom_call.1} parent=1 // pred_check
      _
    $region23: #{tpu_custom_call.1} parent=1 // pred_check_branch
      %68 = sbr.rel (0) target = $region25
    $region24: #{tpu_custom_call.1} parent=1 // pred_region
      %s70 = ssub.s32 384, 384
      %71 = vsyncadd [#allocation4], %s70
      %s72 = sshll.u32 [#allocation7], 4
      %s73 = int_to_ptr.vmem [resolvable:$true] %s72
      %78 = dma.vmem_to_hbm [thread:$0]  %s73, 384, %s2, [#allocation4], 128, 128, 8
    $region25: #{tpu_custom_call.1} parent=1 // pred_fallthru
      _
    // Predicated region
    $region26: #{tpu_custom_call.1} parent=1 // pred_check
      _
    $region27: #{tpu_custom_call.1} parent=1 // pred_check_branch
      %80 = sbr.rel (0) target = $region29
    $region28: #{tpu_custom_call.1} parent=1 // pred_region
      %81 = dma.done [#allocation4], 384
    $region29: #{tpu_custom_call.1} parent=1 // pred_fallthru
      _
    %82 = vsyncpa [#allocation3], 1
    %83 = vsyncpa [#allocation6], 1
    %84 = vsyncpa [#allocation4], 1

</llo_original>
